<compile_context>
chip_gen: v7x
topology: tpu7x:2x2x1
jax: 0.10.0
libtpu: 0.0.40
codegen_flags: <defaults>
</compile_context>

<pallas_src>
import functools

import jax
import jax.numpy as jnp
from jax import lax
from jax.experimental import pallas as pl
from jax.experimental.pallas import tpu as pltpu

_LANES = 128
# ~1 MiB per operand per pipeline buffer -> 8 operands * 2 buffers = 16 MiB,
# comfortably inside the 32 MiB scoped-VMEM limit requested below (and well
# under v7x's 64 MiB physical VMEM).
_TARGET_BLOCK_BYTES = 1 << 20
_VMEM_LIMIT_BYTES = 32 * 1024 * 1024


def _affordance_loss_kernel(
    lane_p_ref, lane_g_ref,
    ang_p_ref, ang_g_ref,
    tld_p_ref, tld_g_ref,
    tls_p_ref, tls_g_ref,
    out_ref, acc_ref,
    *,
    inv_n, rows_total, block_rows, blocks_per_split, group, needs_mask,
):
    c = pl.program_id(0)   # core-split axis ("parallel")
    i = pl.program_id(1)   # row-block axis ("arbitrary", accumulated)

    @pl.when(i == 0)
    def _init():
        acc_ref[...] = jnp.zeros_like(acc_ref)

    f32 = jnp.float32
    lane_p = lane_p_ref[...].astype(f32)
    lane_g = lane_g_ref[...].astype(f32)
    ang_p = ang_p_ref[...].astype(f32)
    ang_g = ang_g_ref[...].astype(f32)
    tld_p = tld_p_ref[...].astype(f32)
    tld_g = tld_g_ref[...].astype(f32)
    p = tls_p_ref[...].astype(f32)
    y = tls_g_ref[...].astype(f32)

    l1 = (jnp.abs(lane_p - lane_g)
          + jnp.abs(ang_p - ang_g)
          + jnp.abs(tld_p - tld_g))

    # BCE with torch.nn.BCELoss semantics (logs clamped at -100 before use).
    # Refactored as -(log1mp + y*(logp - log1mp)): algebraically identical to
    # -(y*logp + (1-y)*log1mp), one fewer multiply/subtract per element.
    log_p = jnp.maximum(jnp.log(p), -100.0)
    log_1mp = jnp.maximum(jnp.log(1.0 - p), -100.0)
    bce = -(log_1mp + y * (log_p - log_1mp))

    fused = l1 + bce

    if needs_mask:
        # Ragged last blocks (and whole overflow blocks created by the
        # rectangular core split) read unspecified data; mask by the global
        # (unclamped) row index before accumulating.
        blk = c * blocks_per_split + i
        row_ids = blk * block_rows + lax.broadcasted_iota(
            jnp.int32, fused.shape, 0)
        fused = jnp.where(row_ids < rows_total, fused, 0.0)

    # Per-step reduction stays on the VPU: fold row groups of 8 together and
    # add into the resident VMEM accumulator.  The single cross-sublane /
    # cross-lane (XLU) reduce happens once, in the finalize branch.
    if group > 1:
        partial = jnp.sum(
            fused.reshape(group, acc_ref.shape[0], fused.shape[1]), axis=0)
    else:
        partial = fused
    acc_ref[...] += partial

    @pl.when(i == pl.num_programs(1) - 1)
    def _finalize():
        total = jnp.sum(acc_ref[...]) * inv_n
        out_ref[...] = jnp.full(out_ref.shape, total, dtype=out_ref.dtype)


def _canonicalize_2d(a):
    if a.ndim == 0:
        return a.reshape(1, 1)
    if a.ndim == 1:
        return a.reshape(1, a.shape[0])
    if a.ndim == 2:
        return a
    # TODO(synk): grid natively over >2-D shapes to avoid this (possible)
    # relayout copy; affordance loss inputs are rank <= 2 in practice.
    return a.reshape(a.shape[0], -1)


def _detect_num_tensorcores():
    """2 for v7x-style megacore chips, else 1.  Safe fallback: 1."""
    try:
        kind = jax.devices()[0].device_kind.lower()
    except Exception:
        return 1
    return 2 if ("v7" in kind or "7x" in kind) else 1


def affordance_predictor_loss(
    lane_distance_pred, lane_distance_gt,
    route_angle_pred, route_angle_gt,
    traffic_light_distance_pred, traffic_light_distance_gt,
    traffic_light_state_pred, traffic_light_state_gt,
    *,
    block_rows=None,
    num_splits=None,
):
    """Scalar loss (float32), matching the PyTorch reference forward."""
    args = [
        lane_distance_pred, lane_distance_gt,
        route_angle_pred, route_angle_gt,
        traffic_light_distance_pred, traffic_light_distance_gt,
        traffic_light_state_pred, traffic_light_state_gt,
    ]
    args = [jnp.asarray(a) for a in args]

    shape = args[0].shape
    for a in args:
        assert a.shape == shape, "all affordance tensors must share a shape"
    n = args[0].size
    assert n > 0, "empty inputs are not supported"

    # Keep floating dtypes as-is (bf16 stays bf16 over the HBM->VMEM DMA);
    # promote only integer/bool inputs.
    args = [a if jnp.issubdtype(a.dtype, jnp.floating) else a.astype(jnp.float32)
            for a in args]
    args = [_canonicalize_2d(a) for a in args]

    d0, cols = args[0].shape
    bpe = max(a.dtype.itemsize for a in args)

    # Pick the row-block size: biggest block <= ~1 MiB per operand, rounded to
    # a multiple of 8 rows (or the full leading extent when it fits whole).
    if block_rows is None:
        rows_target = max(1, _TARGET_BLOCK_BYTES // (bpe * cols))
        if rows_target >= d0:
            block_rows = d0
        else:
            block_rows = max(8, (rows_target // 8) * 8)
    block_rows = min(int(block_rows), d0)
    nb = pl.cdiv(d0, block_rows)

    if num_splits is None:
        num_splits = _detect_num_tensorcores()
    num_splits = max(1, min(int(num_splits), nb))
    bph = pl.cdiv(nb, num_splits)                  # row-blocks per split

    needs_mask = (nb * block_rows != d0) or (num_splits * bph != nb)
    needs_clamp = (num_splits * bph != nb)

    if needs_clamp:
        # Clamp the DMA'd block index so overflow steps re-read a valid block
        # (their contribution is fully masked out in-kernel).
        def in_index_map(c, i):
            return (jnp.minimum(c * bph + i, nb - 1), 0)
    else:
        def in_index_map(c, i):
            return (c * bph + i, 0)

    acc_rows = 8 if (block_rows % 8 == 0) else block_rows
    group = block_rows // acc_rows

    kernel = functools.partial(
        _affordance_loss_kernel,
        inv_n=float(1.0 / n),
        rows_total=d0,
        block_rows=block_rows,
        blocks_per_split=bph,
        group=group,
        needs_mask=needs_mask,
    )

    in_spec = pl.BlockSpec((block_rows, cols), in_index_map)
    out = pl.pallas_call(
        kernel,
        out_shape=jax.ShapeDtypeStruct((1, num_splits * _LANES), jnp.float32),
        grid=(num_splits, bph),
        in_specs=[in_spec] * 8,
        out_specs=pl.BlockSpec((1, _LANES), lambda c, i: (0, c)),
        scratch_shapes=[pltpu.VMEM((acc_rows, cols), jnp.float32)],
        compiler_params=pltpu.CompilerParams(
            dimension_semantics=("parallel", "arbitrary"),
            vmem_limit_bytes=_VMEM_LIMIT_BYTES,
        ),
    )(*args)

    # Each split wrote its partial sum (already scaled by 1/N) into its own
    # lane-dense (1, 128) block; combine the per-core partials here.
    partials = out.reshape(num_splits, _LANES)[:, 0]
    return jnp.sum(partials)


def _reference_loss(lp, lg, ap, ag, tdp, tdg, tsp, tsg):
    lp, lg, ap, ag, tdp, tdg, tsp, tsg = (
        jnp.asarray(x, jnp.float32) for x in (lp, lg, ap, ag, tdp, tdg, tsp, tsg))
    l1 = jnp.mean(jnp.abs(lp - lg))
    l2 = jnp.mean(jnp.abs(ap - ag))
    l3 = jnp.mean(jnp.abs(tdp - tdg))
    log_p = jnp.maximum(jnp.log(tsp), -100.0)
    log_1mp = jnp.maximum(jnp.log(1.0 - tsp), -100.0)
    l4 = jnp.mean(-(tsg * log_p + (1.0 - tsg) * log_1mp))
    return l1 + l2 + l3 + l4


def _make_inputs(key, shape):
    ks = jax.random.split(key, 8)
    lane_p = jax.random.normal(ks[0], shape, jnp.float32)
    lane_g = jax.random.normal(ks[1], shape, jnp.float32)
    ang_p = jax.random.normal(ks[2], shape, jnp.float32)
    ang_g = jax.random.normal(ks[3], shape, jnp.float32)
    tld_p = jax.random.normal(ks[4], shape, jnp.float32)
    tld_g = jax.random.normal(ks[5], shape, jnp.float32)
    # BCE inputs: predictions in (0,1), targets in {0,1}.
    tls_p = jax.nn.sigmoid(jax.random.normal(ks[6], shape, jnp.float32))
    tls_g = (jax.random.uniform(ks[7], shape) > 0.5).astype(jnp.float32)
    return lane_p, lane_g, ang_p, ang_g, tld_p, tld_g, tls_p, tls_g


def _check(got, want, tag):
    assert jnp.allclose(got, want, rtol=3e-5, atol=1e-6), (tag, got, want)


if __name__ == "__main__":
    key = jax.random.PRNGKey(0)
    k1, k2, k3, k4 = jax.random.split(key, 4)

    # Case A: small, unaligned 2-D shape; single exact block (no masking).
    ins = _make_inputs(k1, (6, 20))
    got = affordance_predictor_loss(*ins)
    jax.block_until_ready(got)
    _check(got, _reference_loss(*ins), "case_a")

    # Case B: multi-block accumulation + ragged last block + 2-way core split.
    ins = _make_inputs(k2, (50, 20))
    got = affordance_predictor_loss(*ins, block_rows=16, num_splits=2)
    jax.block_until_ready(got)
    _check(got, _reference_loss(*ins), "case_b")

    # Case C: odd block count -> clamped overflow block on the split axis.
    ins = _make_inputs(k3, (40, 24))
    got = affordance_predictor_loss(*ins, block_rows=8, num_splits=2)
    jax.block_until_ready(got)
    _check(got, _reference_loss(*ins), "case_c")

    # Case D: rank-1 inputs (canonicalized to (1, n)).
    ins = _make_inputs(k4, (37,))
    got = affordance_predictor_loss(*ins)
    jax.block_until_ready(got)
    _check(got, _reference_loss(*ins), "case_d")

    print("KERNEL_OK")
</pallas_src>

<mosaic_0001>
module attributes {stable_mosaic.version = 11 : i64} {
  func.func @_affordance_loss_kernel(%arg0: i32, %arg1: i32, %arg2: memref<6x20xf32, #tpu.memory_space<vmem>>, %arg3: memref<6x20xf32, #tpu.memory_space<vmem>>, %arg4: memref<6x20xf32, #tpu.memory_space<vmem>>, %arg5: memref<6x20xf32, #tpu.memory_space<vmem>>, %arg6: memref<6x20xf32, #tpu.memory_space<vmem>>, %arg7: memref<6x20xf32, #tpu.memory_space<vmem>>, %arg8: memref<6x20xf32, #tpu.memory_space<vmem>>, %arg9: memref<6x20xf32, #tpu.memory_space<vmem>>, %arg10: memref<1x128xf32, #tpu.memory_space<vmem>>, %arg11: memref<6x20xf32, #tpu.memory_space<vmem>>) attributes {dimension_semantics = [#tpu.dimension_semantics<parallel>, #tpu.dimension_semantics<arbitrary>], iteration_bounds = array<i64: 1, 1>, scalar_prefetch = 0 : i64, scratch_operands = 1 : i64, tpu.core_type = #tpu.core_type<tc>, window_params = [{transform_indices = @transform_0, window_bounds = array<i64: 6, 20>}, {transform_indices = @transform_1, window_bounds = array<i64: 6, 20>}, {transform_indices = @transform_2, window_bounds = array<i64: 6, 20>}, {transform_indices = @transform_3, window_bounds = array<i64: 6, 20>}, {transform_indices = @transform_4, window_bounds = array<i64: 6, 20>}, {transform_indices = @transform_5, window_bounds = array<i64: 6, 20>}, {transform_indices = @transform_6, window_bounds = array<i64: 6, 20>}, {transform_indices = @transform_7, window_bounds = array<i64: 6, 20>}, {transform_indices = @transform_8, window_bounds = array<i64: 1, 128>}]} {
    %c0_i32 = arith.constant 0 : i32
    %0 = arith.cmpi eq, %arg1, %c0_i32 : i32
    %1 = arith.extui %0 : i1 to i32
    %c0_i32_0 = arith.constant 0 : i32
    %2 = arith.cmpi ne, %1, %c0_i32_0 : i32
    scf.if %2 {
      %cst_25 = arith.constant 0.000000e+00 : f32
      %39 = vector.broadcast %cst_25 : f32 to vector<6x20xf32>
      %c0_26 = arith.constant 0 : index
      %c0_27 = arith.constant 0 : index
      %40 = vector.load %arg11[%c0_26, %c0_27] : memref<6x20xf32, #tpu.memory_space<vmem>>, vector<6x20xf32>
      tpu.vector_store %arg11[%c0_26, %c0_27], %39 {strides = array<i32>} : memref<6x20xf32, #tpu.memory_space<vmem>>, vector<6x20xf32>,
    } else {
    }
    %c0 = arith.constant 0 : index
    %c0_1 = arith.constant 0 : index
    %3 = vector.load %arg2[%c0, %c0_1] : memref<6x20xf32, #tpu.memory_space<vmem>>, vector<6x20xf32>
    %c0_2 = arith.constant 0 : index
    %c0_3 = arith.constant 0 : index
    %4 = vector.load %arg3[%c0_2, %c0_3] : memref<6x20xf32, #tpu.memory_space<vmem>>, vector<6x20xf32>
    %c0_4 = arith.constant 0 : index
    %c0_5 = arith.constant 0 : index
    %5 = vector.load %arg4[%c0_4, %c0_5] : memref<6x20xf32, #tpu.memory_space<vmem>>, vector<6x20xf32>
    %c0_6 = arith.constant 0 : index
    %c0_7 = arith.constant 0 : index
    %6 = vector.load %arg5[%c0_6, %c0_7] : memref<6x20xf32, #tpu.memory_space<vmem>>, vector<6x20xf32>
    %c0_8 = arith.constant 0 : index
    %c0_9 = arith.constant 0 : index
    %7 = vector.load %arg6[%c0_8, %c0_9] : memref<6x20xf32, #tpu.memory_space<vmem>>, vector<6x20xf32>
    %c0_10 = arith.constant 0 : index
    %c0_11 = arith.constant 0 : index
    %8 = vector.load %arg7[%c0_10, %c0_11] : memref<6x20xf32, #tpu.memory_space<vmem>>, vector<6x20xf32>
    %c0_12 = arith.constant 0 : index
    %c0_13 = arith.constant 0 : index
    %9 = vector.load %arg8[%c0_12, %c0_13] : memref<6x20xf32, #tpu.memory_space<vmem>>, vector<6x20xf32>
    %c0_14 = arith.constant 0 : index
    %c0_15 = arith.constant 0 : index
    %10 = vector.load %arg9[%c0_14, %c0_15] : memref<6x20xf32, #tpu.memory_space<vmem>>, vector<6x20xf32>
    %11 = arith.subf %3, %4 : vector<6x20xf32>
    %12 = math.absf %11 : vector<6x20xf32>
    %13 = arith.subf %5, %6 : vector<6x20xf32>
    %14 = math.absf %13 : vector<6x20xf32>
    %15 = arith.addf %12, %14 : vector<6x20xf32>
    %16 = arith.subf %7, %8 : vector<6x20xf32>
    %17 = math.absf %16 : vector<6x20xf32>
    %18 = arith.addf %15, %17 : vector<6x20xf32>
    %19 = math.log %9 : vector<6x20xf32>
    %cst = arith.constant -1.000000e+02 : f32
    %20 = vector.broadcast %cst : f32 to vector<6x20xf32>
    %21 = arith.maximumf %19, %20 : vector<6x20xf32>
    %cst_16 = arith.constant 1.000000e+00 : f32
    %22 = vector.broadcast %cst_16 : f32 to vector<6x20xf32>
    %23 = arith.subf %22, %9 : vector<6x20xf32>
    %24 = math.log %23 : vector<6x20xf32>
    %cst_17 = arith.constant -1.000000e+02 : f32
    %25 = vector.broadcast %cst_17 : f32 to vector<6x20xf32>
    %26 = arith.maximumf %24, %25 : vector<6x20xf32>
    %27 = arith.subf %21, %26 : vector<6x20xf32>
    %28 = arith.mulf %10, %27 : vector<6x20xf32>
    %29 = arith.addf %26, %28 : vector<6x20xf32>
    %cst_18 = arith.constant 0.000000e+00 : f32
    %30 = vector.broadcast %cst_18 : f32 to vector<6x20xf32>
    %31 = arith.subf %30, %29 : vector<6x20xf32>
    %32 = arith.addf %18, %31 : vector<6x20xf32>
    %c0_19 = arith.constant 0 : index
    %c0_20 = arith.constant 0 : index
    %33 = vector.load %arg11[%c0_19, %c0_20] : memref<6x20xf32, #tpu.memory_space<vmem>>, vector<6x20xf32>
    %34 = arith.addf %33, %32 : vector<6x20xf32>
    %c0_21 = arith.constant 0 : index
    %c0_22 = arith.constant 0 : index
    %35 = vector.load %arg11[%c0_21, %c0_22] : memref<6x20xf32, #tpu.memory_space<vmem>>, vector<6x20xf32>
    tpu.vector_store %arg11[%c0_21, %c0_22], %34 {strides = array<i32>} : memref<6x20xf32, #tpu.memory_space<vmem>>, vector<6x20xf32>,
    %c0_i32_23 = arith.constant 0 : i32
    %36 = arith.cmpi eq, %arg1, %c0_i32_23 : i32
    %37 = arith.extui %36 : i1 to i32
    %c0_i32_24 = arith.constant 0 : i32
    %38 = arith.cmpi ne, %37, %c0_i32_24 : i32
    scf.if %38 {
      %c0_25 = arith.constant 0 : index
      %c0_26 = arith.constant 0 : index
      %39 = vector.load %arg11[%c0_25, %c0_26] : memref<6x20xf32, #tpu.memory_space<vmem>>, vector<6x20xf32>
      %40 = vector.shape_cast %39 : vector<6x20xf32> to vector<1x6x20xf32>
      %cst_27 = arith.constant dense<0.000000e+00> : vector<1xf32>
      %41 = vector.multi_reduction <add>, %40, %cst_27 [1, 2] : vector<1x6x20xf32> to vector<1xf32>
      %42 = vector.shape_cast %41 : vector<1xf32> to vector<1x1x1xf32>
      %43 = vector.extract %42[0, 0, 0] : f32 from vector<1x1x1xf32>
      %cst_28 = arith.constant 0.00833333377 : f32
      %44 = arith.mulf %43, %cst_28 : f32
      %45 = vector.broadcast %44 : f32 to vector<1x128xf32>
      %c0_29 = arith.constant 0 : index
      %c0_30 = arith.constant 0 : index
      %46 = vector.load %arg10[%c0_29, %c0_30] : memref<1x128xf32, #tpu.memory_space<vmem>>, vector<1x128xf32>
      tpu.vector_store %arg10[%c0_29, %c0_30], %45 {strides = array<i32>} : memref<1x128xf32, #tpu.memory_space<vmem>>, vector<1x128xf32>,
    } else {
    }
    return
  }
  func.func @transform_0(%arg0: i32, %arg1: i32) -> (i32, i32) {
    %c1_i32 = arith.constant 1 : i32
    %0 = arith.muli %arg0, %c1_i32 : i32
    %1 = arith.addi %0, %arg1 : i32
    %c0_i32 = arith.constant 0 : i32
    %c0_i32_0 = arith.constant 0 : i32
    return %1, %c0_i32 : i32, i32
  }
  func.func @transform_1(%arg0: i32, %arg1: i32) -> (i32, i32) {
    %c1_i32 = arith.constant 1 : i32
    %0 = arith.muli %arg0, %c1_i32 : i32
    %1 = arith.addi %0, %arg1 : i32
    %c0_i32 = arith.constant 0 : i32
    %c0_i32_0 = arith.constant 0 : i32
    return %1, %c0_i32 : i32, i32
  }
  func.func @transform_2(%arg0: i32, %arg1: i32) -> (i32, i32) {
    %c1_i32 = arith.constant 1 : i32
    %0 = arith.muli %arg0, %c1_i32 : i32
    %1 = arith.addi %0, %arg1 : i32
    %c0_i32 = arith.constant 0 : i32
    %c0_i32_0 = arith.constant 0 : i32
    return %1, %c0_i32 : i32, i32
  }
  func.func @transform_3(%arg0: i32, %arg1: i32) -> (i32, i32) {
    %c1_i32 = arith.constant 1 : i32
    %0 = arith.muli %arg0, %c1_i32 : i32
    %1 = arith.addi %0, %arg1 : i32
    %c0_i32 = arith.constant 0 : i32
    %c0_i32_0 = arith.constant 0 : i32
    return %1, %c0_i32 : i32, i32
  }
  func.func @transform_4(%arg0: i32, %arg1: i32) -> (i32, i32) {
    %c1_i32 = arith.constant 1 : i32
    %0 = arith.muli %arg0, %c1_i32 : i32
    %1 = arith.addi %0, %arg1 : i32
    %c0_i32 = arith.constant 0 : i32
    %c0_i32_0 = arith.constant 0 : i32
    return %1, %c0_i32 : i32, i32
  }
  func.func @transform_5(%arg0: i32, %arg1: i32) -> (i32, i32) {
    %c1_i32 = arith.constant 1 : i32
    %0 = arith.muli %arg0, %c1_i32 : i32
    %1 = arith.addi %0, %arg1 : i32
    %c0_i32 = arith.constant 0 : i32
    %c0_i32_0 = arith.constant 0 : i32
    return %1, %c0_i32 : i32, i32
  }
  func.func @transform_6(%arg0: i32, %arg1: i32) -> (i32, i32) {
    %c1_i32 = arith.constant 1 : i32
    %0 = arith.muli %arg0, %c1_i32 : i32
    %1 = arith.addi %0, %arg1 : i32
    %c0_i32 = arith.constant 0 : i32
    %c0_i32_0 = arith.constant 0 : i32
    return %1, %c0_i32 : i32, i32
  }
  func.func @transform_7(%arg0: i32, %arg1: i32) -> (i32, i32) {
    %c1_i32 = arith.constant 1 : i32
    %0 = arith.muli %arg0, %c1_i32 : i32
    %1 = arith.addi %0, %arg1 : i32
    %c0_i32 = arith.constant 0 : i32
    %c0_i32_0 = arith.constant 0 : i32
    return %1, %c0_i32 : i32, i32
  }
  func.func @transform_8(%arg0: i32, %arg1: i32) -> (i32, i32) {
    %c0_i32 = arith.constant 0 : i32
    %c0_i32_0 = arith.constant 0 : i32
    return %c0_i32, %arg0 : i32, i32
  }
}

</mosaic_0001>

<llo_original>
// kernel: tpu_custom_call.1
$region0: #{tpu_custom_call.1}
  #allocation0 [shape = 'u32[]', space=smem, size = 0x4, offset = 0x4, fixed_abs, tag = 'smem constant byte address 0x4 - core index']
  #allocation1 [shape = 'u32[144,128]{1,0:T(1,128)}', space=vmem, size = 0x12000, scoped, tag = 'internal scratch']
  #allocation2 [shape = 'f32[6,20]{1,0:T(8,128)}', space=vmem, size = 0x1000, scoped, tag = 'scratch operand']
  %s0 = inlined_call_operand.hbm [shape: f32[6,20], index: 0, kind: input, shape index: {}]
  %s1 = inlined_call_operand.hbm [shape: f32[6,20], index: 1, kind: input, shape index: {}]
  %s2 = inlined_call_operand.hbm [shape: f32[6,20], index: 2, kind: input, shape index: {}]
  %s3 = inlined_call_operand.vmem [shape: f32[6,20], index: 3, kind: input, shape index: {}]
  %s4 = inlined_call_operand.hbm [shape: f32[6,20], index: 4, kind: input, shape index: {}]
  %s5 = inlined_call_operand.vmem [shape: f32[6,20], index: 5, kind: input, shape index: {}]
  %s6 = inlined_call_operand.hbm [shape: f32[6,20], index: 6, kind: input, shape index: {}]
  %s7 = inlined_call_operand.vmem [shape: f32[6,20], index: 7, kind: input, shape index: {}]
  %s8 = inlined_call_operand.hbm [shape: f32[1,128], index: 8, kind: output, shape index: {}]
  %s9 = sld [smem:[#allocation0]]
  $region70: #{tpu_custom_call.1} parent=0
    _
  %s11 = ssub.s32 1, %s9
  %s12 = scalar_select 0, %s11, %s9
  $region1: #{tpu_custom_call.1} parent=0
    #allocation3 [shape = 'u8[4096]{0}', space=vmem, size = 0x1000, scoped, tag = 'input window, operand 0, single buffered']
    #allocation4 [shape = 's32[1]{0}', space=sflag, size = 0x4, scoped, tag = 'scoped memory for tpu_custom_call.1']
    #allocation5 [shape = 's32[1]{0}', space=sflag, size = 0x4, scoped, tag = 'scoped memory for tpu_custom_call.1']
    #allocation6 [shape = 'u8[4096]{0}', space=vmem, size = 0x1000, scoped, tag = 'input window, operand 1, single buffered']
    #allocation7 [shape = 's32[1]{0}', space=sflag, size = 0x4, scoped, tag = 'scoped memory for tpu_custom_call.1']
    #allocation8 [shape = 'u8[4096]{0}', space=vmem, size = 0x1000, scoped, tag = 'input window, operand 2, single buffered']
    #allocation9 [shape = 'u8[4096]{0}', space=vmem, size = 0x1000, scoped, tag = 'input window, operand 4, single buffered']
    #allocation10 [shape = 's32[1]{0}', space=sflag, size = 0x4, scoped, tag = 'scoped memory for tpu_custom_call.1']
    #allocation11 [shape = 'u8[4096]{0}', space=vmem, size = 0x1000, scoped, tag = 'input window, operand 6, single buffered']
    #allocation12 [shape = 'u8[512]{0}', space=vmem, size = 0x400, scoped, tag = 'output window, operand 0, single buffered']
    %13 = vsyncpa [#allocation4], 0
    %14 = vsyncpa [#allocation7], 0
    %15 = vsyncpa [#allocation10], 0
    %16 = vsyncpa [#allocation5], 0
    // Predicated region
    $region2: #{tpu_custom_call.1} parent=1 // pred_check
      _
    $region3: #{tpu_custom_call.1} parent=1 // pred_check_branch
      %18 = sbr.rel (0) target = $region5
    $region4: #{tpu_custom_call.1} parent=1 // pred_region
      %s19 = sadd.s32 0, 0
      %s21 = ssub.s32 128, 128
      %22 = vsyncadd [#allocation4], %s21
      %s23 = smul.addr %s19, 128
      %s24 = scalar_lea.hbm %s0, %s23
      %s26 = sshll.u32 [#allocation3], 4
      %s27 = int_to_ptr.vmem [resolvable:$true] %s26
      %29 = dma.hbm_to_vmem [thread:$0]  %s24, 128, %s27, [#allocation4]
    $region5: #{tpu_custom_call.1} parent=1 // pred_fallthru
      _
    // Predicated region
    $region6: #{tpu_custom_call.1} parent=1 // pred_check
      _
    $region7: #{tpu_custom_call.1} parent=1 // pred_check_branch
      %31 = sbr.rel (0) target = $region9
    $region8: #{tpu_custom_call.1} parent=1 // pred_region
      %s32 = sadd.s32 0, 0
      %s34 = ssub.s32 128, 128
      %35 = vsyncadd [#allocation7], %s34
      %s36 = smul.addr %s32, 128
      %s37 = scalar_lea.hbm %s1, %s36
      %s39 = sshll.u32 [#allocation6], 4
      %s40 = int_to_ptr.vmem [resolvable:$true] %s39
      %42 = dma.hbm_to_vmem [thread:$0]  %s37, 128, %s40, [#allocation7]
    $region9: #{tpu_custom_call.1} parent=1 // pred_fallthru
      _
    // Predicated region
    $region10: #{tpu_custom_call.1} parent=1 // pred_check
      _
    $region11: #{tpu_custom_call.1} parent=1 // pred_check_branch
      %44 = sbr.rel (0) target = $region13
    $region12: #{tpu_custom_call.1} parent=1 // pred_region
      %s45 = sadd.s32 0, 0
      %s47 = ssub.s32 128, 128
      %48 = vsyncadd [#allocation7], %s47
      %s49 = smul.addr %s45, 128
      %s50 = scalar_lea.hbm %s2, %s49
      %s52 = sshll.u32 [#allocation8], 4
      %s53 = int_to_ptr.vmem [resolvable:$true] %s52
      %55 = dma.hbm_to_vmem [thread:$0]  %s50, 128, %s53, [#allocation7]
    $region13: #{tpu_custom_call.1} parent=1 // pred_fallthru
      _
    // Predicated region
    $region14: #{tpu_custom_call.1} parent=1 // pred_check
      _
    $region15: #{tpu_custom_call.1} parent=1 // pred_check_branch
      %57 = sbr.rel (0) target = $region17
    $region16: #{tpu_custom_call.1} parent=1 // pred_region
      %s58 = sadd.s32 0, 0
      %p59 = scmp.lt.s32.totalorder %s58, 0
      %s60 = scalar_select %p59, %s58, 0
      %s61 = smul.addr %s60, 8
      %s62 = scalar_lea.vmem %s3, %s61
      %s63 = sadd.s32 0, 0
    $region17: #{tpu_custom_call.1} parent=1 // pred_fallthru
      _
    // Predicated region
    $region18: #{tpu_custom_call.1} parent=1 // pred_check
      _
    $region19: #{tpu_custom_call.1} parent=1 // pred_check_branch
      %65 = sbr.rel (0) target = $region21
    $region20: #{tpu_custom_call.1} parent=1 // pred_region
      %s66 = sadd.s32 0, 0
      %s68 = ssub.s32 128, 128
      %69 = vsyncadd [#allocation10], %s68
      %s70 = smul.addr %s66, 128
      %s71 = scalar_lea.hbm %s4, %s70
      %s73 = sshll.u32 [#allocation9], 4
      %s74 = int_to_ptr.vmem [resolvable:$true] %s73
      %76 = dma.hbm_to_vmem [thread:$0]  %s71, 128, %s74, [#allocation10]
    $region21: #{tpu_custom_call.1} parent=1 // pred_fallthru
      _
    // Predicated region
    $region22: #{tpu_custom_call.1} parent=1 // pred_check
      _
    $region23: #{tpu_custom_call.1} parent=1 // pred_check_branch
      %78 = sbr.rel (0) target = $region25
    $region24: #{tpu_custom_call.1} parent=1 // pred_region
      %s79 = sadd.s32 0, 0
      %p80 = scmp.lt.s32.totalorder %s79, 0
      %s81 = scalar_select %p80, %s79, 0
      %s82 = smul.addr %s81, 8
      %s83 = scalar_lea.vmem %s5, %s82
      %s84 = sadd.s32 0, 0
    $region25: #{tpu_custom_call.1} parent=1 // pred_fallthru
      _
    // Predicated region
    $region26: #{tpu_custom_call.1} parent=1 // pred_check
      _
    $region27: #{tpu_custom_call.1} parent=1 // pred_check_branch
      %86 = sbr.rel (0) target = $region29
    $region28: #{tpu_custom_call.1} parent=1 // pred_region
      %s87 = sadd.s32 0, 0
      %s89 = ssub.s32 128, 128
      %90 = vsyncadd [#allocation10], %s89
      %s91 = smul.addr %s87, 128
      %s92 = scalar_lea.hbm %s6, %s91
      %s94 = sshll.u32 [#allocation11], 4
      %s95 = int_to_ptr.vmem [resolvable:$true] %s94
      %97 = dma.hbm_to_vmem [thread:$0]  %s92, 128, %s95, [#allocation10]
    $region29: #{tpu_custom_call.1} parent=1 // pred_fallthru
      _
    // Predicated region
    $region30: #{tpu_custom_call.1} parent=1 // pred_check
      _
    $region31: #{tpu_custom_call.1} parent=1 // pred_check_branch
      %99 = sbr.rel (0) target = $region33
    $region32: #{tpu_custom_call.1} parent=1 // pred_region
      %s100 = sadd.s32 0, 0
      %p101 = scmp.lt.s32.totalorder %s100, 0
      %s102 = scalar_select %p101, %s100, 0
      %s103 = smul.addr %s102, 8
      %s104 = scalar_lea.vmem %s7, %s103
      %s105 = sadd.s32 0, 0
    $region33: #{tpu_custom_call.1} parent=1 // pred_fallthru
      _
    // Predicated region
    $region34: #{tpu_custom_call.1} parent=1 // pred_check
      _
    $region35: #{tpu_custom_call.1} parent=1 // pred_check_branch
      %107 = sbr.rel (0) target = $region37
    $region36: #{tpu_custom_call.1} parent=1 // pred_region
      %108 = dma.done [#allocation4], 128
    $region37: #{tpu_custom_call.1} parent=1 // pred_fallthru
      _
    // Predicated region
    $region38: #{tpu_custom_call.1} parent=1 // pred_check
      _
    $region39: #{tpu_custom_call.1} parent=1 // pred_check_branch
      %110 = sbr.rel (0) target = $region41
    $region40: #{tpu_custom_call.1} parent=1 // pred_region
      %111 = dma.done [#allocation7], 128
    $region41: #{tpu_custom_call.1} parent=1 // pred_fallthru
      _
    // Predicated region
    $region42: #{tpu_custom_call.1} parent=1 // pred_check
      _
    $region43: #{tpu_custom_call.1} parent=1 // pred_check_branch
      %113 = sbr.rel (0) target = $region45
    $region44: #{tpu_custom_call.1} parent=1 // pred_region
      %114 = dma.done [#allocation7], 128
    $region45: #{tpu_custom_call.1} parent=1 // pred_fallthru
      _
    // Predicated region
    $region46: #{tpu_custom_call.1} parent=1 // pred_check
      _
    $region47: #{tpu_custom_call.1} parent=1 // pred_check_branch
      %116 = sbr.rel (0) target = $region49
    $region48: #{tpu_custom_call.1} parent=1 // pred_region
      %117 = dma.done [#allocation10], 128
    $region49: #{tpu_custom_call.1} parent=1 // pred_fallthru
      _
    // Predicated region
    $region50: #{tpu_custom_call.1} parent=1 // pred_check
      _
    $region51: #{tpu_custom_call.1} parent=1 // pred_check_branch
      %119 = sbr.rel (0) target = $region53
    $region52: #{tpu_custom_call.1} parent=1 // pred_region
      %120 = dma.done [#allocation10], 128
    $region53: #{tpu_custom_call.1} parent=1 // pred_fallthru
      _
    %s121 = sadd.s32 0, 0
    %p122 = scmp.lt.s32.totalorder %s121, 0
    %s123 = scalar_select %p122, %s121, 0
    %s124 = smul.addr %s123, 8
    %s125 = scalar_lea.vmem %s3, %s124
    %s126 = sadd.s32 0, 0
    %p127 = scmp.lt.s32.totalorder %s126, 0
    %s128 = scalar_select %p127, %s126, 0
    %s129 = smul.addr %s128, 8
    %s130 = scalar_lea.vmem %s5, %s129
    %s131 = sadd.s32 0, 0
    %p132 = scmp.lt.s32.totalorder %s131, 0
    %s133 = scalar_select %p132, %s131, 0
    %s134 = smul.addr %s133, 8
    %s135 = scalar_lea.vmem %s7, %s134
    %s136 = sadd.s32 0, 0
    %s137 = sadd.s32 0, 0
    %s138 = sadd.s32 0, 0
    %s139 = sadd.s32 0, 0
    %p140 = scmp.lt.s32.totalorder %s139, 0
    %s141 = scalar_select %p140, %s139, 0
    %s142 = smul.addr %s141, 8
    %s143 = scalar_lea.vmem %s3, %s142
    %s144 = sadd.s32 0, 0
    %s145 = sadd.s32 0, 0
    %s146 = sadd.s32 0, 0
    %p147 = scmp.lt.s32.totalorder %s146, 0
    %s148 = scalar_select %p147, %s146, 0
    %s149 = smul.addr %s148, 8
    %s150 = scalar_lea.vmem %s5, %s149
    %s151 = sadd.s32 0, 0
    %s152 = sadd.s32 0, 0
    %s153 = sadd.s32 0, 0
    %p154 = scmp.lt.s32.totalorder %s153, 0
    %s155 = scalar_select %p154, %s153, 0
    %s156 = smul.addr %s155, 8
    %s157 = scalar_lea.vmem %s7, %s156
    %s158 = sadd.s32 0, 0
    %p159 = scmp.eq.s32.totalorder 0, 0
    // Predicated region
    $region54: #{tpu_custom_call.1} parent=1 // pred_check
      %p160 = pneg %p159
    $region55: #{tpu_custom_call.1} parent=1 // pred_check_branch
      %162 = sbr.rel (%p160) target = $region57
    $region56: #{tpu_custom_call.1} parent=1 // pred_region
      %vm163 = vcmask 160768
      %164 = vst.msk [vmem:[#allocation2] sm:$0x3f] %vm163, 0.0
    $region57: #{tpu_custom_call.1} parent=1 // pred_fallthru
      _
    %v165 = vld [vmem:[#allocation3] sm:$0x3f]
    %v166 = vld [vmem:[#allocation6] sm:$0x3f]
    %v167 = vld [vmem:[#allocation8] sm:$0x3f]
    %v168 = vld [vmem:[%s143] sm:$0x3f]
    %v169 = vld [vmem:[#allocation9] sm:$0x3f]
    %v170 = vld [vmem:[%s150] sm:$0x3f]
    %v171 = vld [vmem:[#allocation11] sm:$0x3f]
    %v172 = vld [vmem:[%s157] sm:$0x3f]
    %v173 = vsub.f32 %v165, %v166
    %v174 = vand.u32 2147483647, %v173
    %v175 = vsub.f32 %v167, %v168
    %v176 = vand.u32 2147483647, %v175
    %v177 = vadd.f32 %v174, %v176
    %v178 = vsub.f32 %v169, %v170
    %v179 = vand.u32 2147483647, %v178
    %v180 = vadd.f32 %v177, %v179
    %v181 = vlog2.pop %v171
    %v182 = vmul.f32 %v181, 0.6931472
    %v183 = vmax.f32 %v182, -100.0
    %v184 = vsub.f32 1.0, %v171
    %v185 = vlog2.pop %v184
    %v186 = vmul.f32 %v185, 0.6931472
    %v187 = vmax.f32 %v186, -100.0
    %v188 = vsub.f32 %v183, %v187
    %v189 = vmul.f32 %v172, %v188
    %v190 = vadd.f32 %v187, %v189
    %v191 = vsub.f32 0.0, %v190
    %v192 = vadd.f32 %v180, %v191
    %v193 = vld [vmem:[#allocation2] sm:$0x3f]
    %v194 = vadd.f32 %v193, %v192
    %vm195 = vcmask 160768
    %196 = vst.msk [vmem:[#allocation2] sm:$0x3f] %vm195, %v194
    // Predicated region
    $region58: #{tpu_custom_call.1} parent=1 // pred_check
      %p197 = pneg %p159
    $region59: #{tpu_custom_call.1} parent=1 // pred_check_branch
      %199 = sbr.rel (%p197) target = $region61
    $region60: #{tpu_custom_call.1} parent=1 // pred_region
      %v200 = vld [vmem:[#allocation2] sm:$0x3f]
      %v201 = vsel %vm195, %v200, 0.0
      %202 = vadd.xlane.f32.xlu0 %v201
      %v203 = vpop.xlane.xlu0 %202
      %v204 = vrot.slane %v203, 4
      %v205 = vadd.f32 %v203, %v204
      %v206 = vrot.slane %v205, 2
      %v207 = vadd.f32 %v205, %v206
      %v208 = vrot.slane %v207, 1
      %v209 = vadd.f32 %v207, %v208
      %s210 = vtos %v209
      %s211 = smul.f32 %s210, 0.008333334
      %v212 = vstv %s211
      %213 = vst [vmem:[#allocation12] sm:$0x1] %v212
    $region61: #{tpu_custom_call.1} parent=1 // pred_fallthru
      _
    // Predicated region
    $region62: #{tpu_custom_call.1} parent=1 // pred_check
      _
    $region63: #{tpu_custom_call.1} parent=1 // pred_check_branch
      %215 = sbr.rel (0) target = $region65
    $region64: #{tpu_custom_call.1} parent=1 // pred_region
      %s217 = ssub.s32 16, 16
      %218 = vsyncadd [#allocation5], %s217
      %s220 = sshll.u32 [#allocation12], 4
      %s221 = int_to_ptr.vmem [resolvable:$true] %s220
      %223 = dma.vmem_to_hbm [thread:$0]  %s221, 16, %s8, [#allocation5]
    $region65: #{tpu_custom_call.1} parent=1 // pred_fallthru
      _
    // Predicated region
    $region66: #{tpu_custom_call.1} parent=1 // pred_check
      _
    $region67: #{tpu_custom_call.1} parent=1 // pred_check_branch
      %225 = sbr.rel (0) target = $region69
    $region68: #{tpu_custom_call.1} parent=1 // pred_region
      %226 = dma.done [#allocation5], 16
    $region69: #{tpu_custom_call.1} parent=1 // pred_fallthru
      _
    %227 = vsyncpa [#allocation4], 1
    %228 = vsyncpa [#allocation7], 1
    %229 = vsyncpa [#allocation10], 1
    %230 = vsyncpa [#allocation5], 1

</llo_original>
